<compile_context>
chip_gen: v6e
topology: v6e:2x2x1
jax: 0.10.0
libtpu: 0.0.40
codegen_flags: <defaults>
</compile_context>

<pallas_src>
import functools

import jax
import jax.numpy as jnp
from jax import lax
from jax.experimental import pallas as pl
from jax.experimental.pallas import tpu as pltpu


# -----------------------------------------------------------------------------
# Tiling helpers
# -----------------------------------------------------------------------------
# Tile targets: 256/512-aligned to keep the v6e/v7x 2x256x256 MXU (and the v5e
# 4x128x128 MXU) fully fed.  Worst case (f32, 512x512 tiles) the double-buffered
# lhs+rhs+out tiles plus the f32 accumulator are ~7 MiB -- well under the 32 MiB
# default scoped-VMEM and v7x's 64 MiB physical VMEM, so no vmem_limit bump is
# needed while still amortizing the ~0.35 us/grid-step overhead.
_ROW_TILE = 256    # sublane-side dims (align 8)
_LANE_TILE = 512   # lane-side dims / reductions (align 128)


def _round_up(x, m):
    return (x + m - 1) // m * m


def _tile(dim, target, align):
    # Largest tile <= target that is a multiple of `align` (small dims collapse
    # to a single aligned tile; the wrapper pads the array up to it).
    return min(target, _round_up(dim, align))


def _pad2(a, rows, cols):
    r, c = a.shape
    if r == rows and c == cols:
        return a
    return jnp.pad(a, ((0, rows - r), (0, cols - c)))


_MOSAIC_PARAMS = pltpu.CompilerParams(
    # M, N parallel (megacore / v7x dual-TC sharding); K is the reduction.
    dimension_semantics=("parallel", "parallel", "arbitrary"))


# -----------------------------------------------------------------------------
# GELU (tanh form) and its analytic derivative, evaluated in f32 in-kernel.
# -----------------------------------------------------------------------------
# TODO(synk): PyTorch nn.GELU defaults to the exact erf form; the tanh
# approximation is used here (maps directly onto the EUP tanh path) and the
# reference check below uses the same approximation.
_SQRT_2_OVER_PI = 0.7978845608028654
_GELU_C = 0.044715


def _gelu_tanh_grad(z):
    u = _SQRT_2_OVER_PI * (z + _GELU_C * z * z * z)
    t = jnp.tanh(u)
    du = _SQRT_2_OVER_PI * (1.0 + 3.0 * _GELU_C * z * z)
    return 0.5 * (1.0 + t) + 0.5 * z * (1.0 - t * t) * du


# -----------------------------------------------------------------------------
# Kernels
# -----------------------------------------------------------------------------
def _linear_gelu_kernel(x_ref, w_ref, b_ref, o_ref, acc_ref):
    """One (tm, tn) output tile of gelu(x @ W + b); K-reduction over grid axis 2."""
    @pl.when(pl.program_id(2) == 0)
    def _():
        acc_ref[...] = jnp.zeros_like(acc_ref)

    # Native-dtype MXU feed; f32 accumulation.
    acc_ref[...] += jnp.dot(x_ref[...], w_ref[...],
                            preferred_element_type=jnp.float32)

    @pl.when(pl.program_id(2) == pl.num_programs(2) - 1)
    def _():
        # Bias + GELU only once per output tile (not per K step); epilogue in
        # f32, cast only on the final store (v5e has no bf16 VPU/EUP).
        z = acc_ref[...] + b_ref[...].astype(jnp.float32)
        o_ref[...] = jax.nn.gelu(z, approximate=True).astype(o_ref.dtype)


def _linear_dgelu_kernel(x_ref, w_ref, b_ref, dy_ref, dz_ref, acc_ref):
    """dz = dy * gelu'(x @ W + b)  (checkpoint-style recompute of z, fused)."""
    @pl.when(pl.program_id(2) == 0)
    def _():
        acc_ref[...] = jnp.zeros_like(acc_ref)

    acc_ref[...] += jnp.dot(x_ref[...], w_ref[...],
                            preferred_element_type=jnp.float32)

    @pl.when(pl.program_id(2) == pl.num_programs(2) - 1)
    def _():
        z = acc_ref[...] + b_ref[...].astype(jnp.float32)
        dz = dy_ref[...].astype(jnp.float32) * _gelu_tanh_grad(z)
        dz_ref[...] = dz.astype(dz_ref.dtype)


def _matmul_nt_kernel(a_ref, b_ref, o_ref, acc_ref):
    """C = A @ B^T with B stored untransposed (contract last dims)."""
    @pl.when(pl.program_id(2) == 0)
    def _():
        acc_ref[...] = jnp.zeros_like(acc_ref)

    acc_ref[...] += lax.dot_general(
        a_ref[...], b_ref[...],
        dimension_numbers=(((1,), (1,)), ((), ())),
        preferred_element_type=jnp.float32)

    @pl.when(pl.program_id(2) == pl.num_programs(2) - 1)
    def _():
        o_ref[...] = acc_ref[...].astype(o_ref.dtype)


def _matmul_tn_kernel(a_ref, b_ref, o_ref, acc_ref):
    """C = A^T @ B with A stored untransposed (contract first dims)."""
    @pl.when(pl.program_id(2) == 0)
    def _():
        acc_ref[...] = jnp.zeros_like(acc_ref)

    acc_ref[...] += lax.dot_general(
        a_ref[...], b_ref[...],
        dimension_numbers=(((0,), (0,)), ((), ())),
        preferred_element_type=jnp.float32)

    @pl.when(pl.program_id(2) == pl.num_programs(2) - 1)
    def _():
        o_ref[...] = acc_ref[...].astype(o_ref.dtype)


# -----------------------------------------------------------------------------
# pallas_call wrappers (padding + tiled grids)
# -----------------------------------------------------------------------------
def _linear_gelu_fwd_pallas(x2d, w, b):
    """x2d: (M, K), w: (K, N), b: (N,) -> gelu(x2d @ w + b), shape (M, N)."""
    M, K = x2d.shape
    K2, N = w.shape
    assert K == K2 and b.shape == (N,)
    tm = _tile(M, _ROW_TILE, 8)
    tn = _tile(N, _LANE_TILE, 128)
    tk = _tile(K, _LANE_TILE, 128)
    Mp, Np, Kp = _round_up(M, tm), _round_up(N, tn), _round_up(K, tk)
    xp = _pad2(x2d, Mp, Kp)
    wp = _pad2(w, Kp, Np)
    bp = _pad2(b.reshape(1, N), 1, Np)
    itemsize = jnp.dtype(x2d.dtype).itemsize
    cost = pl.CostEstimate(
        flops=2 * Mp * Np * Kp,
        transcendentals=Mp * Np,
        bytes_accessed=(xp.size + wp.size + bp.size + Mp * Np) * itemsize)

    out = pl.pallas_call(
        _linear_gelu_kernel,
        out_shape=jax.ShapeDtypeStruct((Mp, Np), x2d.dtype),
        grid_spec=pltpu.PrefetchScalarGridSpec(
            num_scalar_prefetch=0,
            grid=(Mp // tm, Np // tn, Kp // tk),
            in_specs=[
                pl.BlockSpec((tm, tk), lambda i, j, k: (i, k)),
                pl.BlockSpec((tk, tn), lambda i, j, k: (k, j)),
                pl.BlockSpec((1, tn), lambda i, j, k: (0, j)),
            ],
            out_specs=pl.BlockSpec((tm, tn), lambda i, j, k: (i, j)),
            scratch_shapes=[pltpu.VMEM((tm, tn), jnp.float32)]),
        compiler_params=_MOSAIC_PARAMS,
        cost_estimate=cost,
    )(xp, wp, bp)
    return out[:M, :N]


def _linear_dgelu_pallas(x2d, w, b, dy):
    """dz = dy * gelu'(x2d @ w + b), shape (M, N)."""
    M, K = x2d.shape
    _, N = w.shape
    tm = _tile(M, _ROW_TILE, 8)
    tn = _tile(N, _LANE_TILE, 128)
    tk = _tile(K, _LANE_TILE, 128)
    Mp, Np, Kp = _round_up(M, tm), _round_up(N, tn), _round_up(K, tk)
    xp = _pad2(x2d, Mp, Kp)
    wp = _pad2(w, Kp, Np)
    bp = _pad2(b.reshape(1, N), 1, Np)
    dyp = _pad2(dy, Mp, Np)
    itemsize = jnp.dtype(x2d.dtype).itemsize
    cost = pl.CostEstimate(
        flops=2 * Mp * Np * Kp,
        transcendentals=Mp * Np,
        bytes_accessed=(xp.size + wp.size + bp.size + 2 * Mp * Np) * itemsize)

    dz = pl.pallas_call(
        _linear_dgelu_kernel,
        out_shape=jax.ShapeDtypeStruct((Mp, Np), dy.dtype),
        grid_spec=pltpu.PrefetchScalarGridSpec(
            num_scalar_prefetch=0,
            grid=(Mp // tm, Np // tn, Kp // tk),
            in_specs=[
                pl.BlockSpec((tm, tk), lambda i, j, k: (i, k)),
                pl.BlockSpec((tk, tn), lambda i, j, k: (k, j)),
                pl.BlockSpec((1, tn), lambda i, j, k: (0, j)),
                pl.BlockSpec((tm, tn), lambda i, j, k: (i, j)),
            ],
            out_specs=pl.BlockSpec((tm, tn), lambda i, j, k: (i, j)),
            scratch_shapes=[pltpu.VMEM((tm, tn), jnp.float32)]),
        compiler_params=_MOSAIC_PARAMS,
        cost_estimate=cost,
    )(xp, wp, bp, dyp)
    return dz[:M, :N]


def _matmul_nt_pallas(a, b, out_dtype):
    """(M, N) @ (P, N)^T -> (M, P); B kept in its stored layout (no HBM transpose)."""
    M, N = a.shape
    P, N2 = b.shape
    assert N == N2
    tm = _tile(M, _ROW_TILE, 8)
    tp = _tile(P, _LANE_TILE, 128)
    tk = _tile(N, _LANE_TILE, 128)
    Mp, Pp, Np = _round_up(M, tm), _round_up(P, tp), _round_up(N, tk)
    ap = _pad2(a, Mp, Np)
    bp = _pad2(b, Pp, Np)
    itemsize = jnp.dtype(a.dtype).itemsize
    cost = pl.CostEstimate(
        flops=2 * Mp * Pp * Np, transcendentals=0,
        bytes_accessed=(ap.size + bp.size + Mp * Pp) * itemsize)

    out = pl.pallas_call(
        _matmul_nt_kernel,
        out_shape=jax.ShapeDtypeStruct((Mp, Pp), out_dtype),
        grid_spec=pltpu.PrefetchScalarGridSpec(
            num_scalar_prefetch=0,
            grid=(Mp // tm, Pp // tp, Np // tk),
            in_specs=[
                pl.BlockSpec((tm, tk), lambda i, j, k: (i, k)),
                pl.BlockSpec((tp, tk), lambda i, j, k: (j, k)),
            ],
            out_specs=pl.BlockSpec((tm, tp), lambda i, j, k: (i, j)),
            scratch_shapes=[pltpu.VMEM((tm, tp), jnp.float32)]),
        compiler_params=_MOSAIC_PARAMS,
        cost_estimate=cost,
    )(ap, bp)
    return out[:M, :P]


def _matmul_tn_pallas(a, b, out_dtype):
    """(M, K)^T @ (M, N) -> (K, N); A kept in its stored layout (no HBM transpose)."""
    M, K = a.shape
    M2, N = b.shape
    assert M == M2
    tr = _tile(M, _ROW_TILE, 8)      # reduction (sublane of both inputs)
    ti = _tile(K, _LANE_TILE, 128)
    tj = _tile(N, _LANE_TILE, 128)
    Mp, Kp, Np = _round_up(M, tr), _round_up(K, ti), _round_up(N, tj)
    ap = _pad2(a, Mp, Kp)
    bp = _pad2(b, Mp, Np)
    itemsize = jnp.dtype(a.dtype).itemsize
    cost = pl.CostEstimate(
        flops=2 * Kp * Np * Mp, transcendentals=0,
        bytes_accessed=(ap.size + bp.size + Kp * Np) * itemsize)

    out = pl.pallas_call(
        _matmul_tn_kernel,
        out_shape=jax.ShapeDtypeStruct((Kp, Np), out_dtype),
        grid_spec=pltpu.PrefetchScalarGridSpec(
            num_scalar_prefetch=0,
            grid=(Kp // ti, Np // tj, Mp // tr),
            in_specs=[
                pl.BlockSpec((tr, ti), lambda i, j, r: (r, i)),
                pl.BlockSpec((tr, tj), lambda i, j, r: (r, j)),
            ],
            out_specs=pl.BlockSpec((ti, tj), lambda i, j, r: (i, j)),
            scratch_shapes=[pltpu.VMEM((ti, tj), jnp.float32)]),
        compiler_params=_MOSAIC_PARAMS,
        cost_estimate=cost,
    )(ap, bp)
    return out[:K, :N]


# -----------------------------------------------------------------------------
# custom_vjp: forward = fused kernel; backward = explicit Pallas kernels so
# jax.checkpoint never tries to autodiff through pallas_call.
# -----------------------------------------------------------------------------
@jax.custom_vjp
def linear_gelu(x2d, w, b):
    return _linear_gelu_fwd_pallas(x2d, w, b)


def _linear_gelu_vjp_fwd(x2d, w, b):
    # Residuals are just the primal inputs (checkpoint-friendly: the
    # pre-activation z is recomputed inside the fused dz kernel).
    return _linear_gelu_fwd_pallas(x2d, w, b), (x2d, w, b)


def _linear_gelu_vjp_bwd(res, dy):
    x2d, w, b = res
    dz = _linear_dgelu_pallas(x2d, w, b, dy)               # dy * gelu'(x@W+b)
    dx = _matmul_nt_pallas(dz, w, out_dtype=x2d.dtype)     # dz @ W^T
    dw = _matmul_tn_pallas(x2d, dz, out_dtype=w.dtype)     # X^T @ dz
    db = jnp.sum(dz.astype(jnp.float32), axis=0).astype(b.dtype)  # cheap VPU reduce
    return dx, dw, db


linear_gelu.defvjp(_linear_gelu_vjp_fwd, _linear_gelu_vjp_bwd)


# -----------------------------------------------------------------------------
# The wrapped module and the CheckpointWrapper equivalent
# -----------------------------------------------------------------------------
def inner_module_forward(params, x):
    """The wrapped module: Linear(H, H) + GELU on (B, S, H).

    params["weight"] is stored in (H_in, H_out) layout so the kernel consumes
    it directly; a PyTorch (out, in) weight would be transposed once at
    parameter-conversion time, never per call.
    """
    B, S, H = x.shape
    w, b = params["weight"], params["bias"]
    y2d = linear_gelu(x.reshape(B * S, H), w, b)
    return y2d.reshape(B, S, -1)


def make_checkpoint_wrapper(module_fn):
    """JAX equivalent of CheckpointWrapper: remat the wrapped module's forward.

    Forward values are identical to calling module_fn directly; only the
    backward recomputes activations (matching use_reentrant checkpointing).
    """
    @functools.wraps(module_fn)
    def forward(params, *args, **kwargs):
        # TODO(synk): PyTorch's map_args_kwargs_to_args re-orders kwargs by the
        # inner forward's signature; in JAX we simply forward args/kwargs.
        return jax.checkpoint(module_fn)(params, *args, **kwargs)
    return forward


# -----------------------------------------------------------------------------
# Demo / self-check
# -----------------------------------------------------------------------------
if __name__ == "__main__":
    key = jax.random.PRNGKey(0)
    k_x, k_w, k_b = jax.random.split(key, 3)

    B, S, H = 2, 8, 32
    x = jax.random.normal(k_x, (B, S, H), dtype=jnp.float32)

    params = {
        # (H_in, H_out) layout: no per-call transpose in the hot path.
        "weight": jax.random.normal(k_w, (H, H), dtype=jnp.float32) * 0.02,
        "bias": jax.random.normal(k_b, (H,), dtype=jnp.float32) * 0.01,
    }

    checkpointed_forward = make_checkpoint_wrapper(inner_module_forward)

    # Forward (checkpointing does not change forward values).
    out = jax.jit(checkpointed_forward)(params, x)
    jax.block_until_ready(out)

    ref = jax.nn.gelu(x @ params["weight"] + params["bias"])
    assert out.shape == (B, S, H)
    assert jnp.allclose(out, ref, atol=1e-5, rtol=1e-5)

    # Backward through jax.checkpoint + custom_vjp (Pallas backward kernels)
    # against plain-JAX autodiff.
    def loss(p, xx):
        return jnp.sum(checkpointed_forward(p, xx) ** 2)

    def ref_loss(p, xx):
        return jnp.sum(jax.nn.gelu(xx @ p["weight"] + p["bias"]) ** 2)

    grads = jax.jit(jax.grad(loss))(params, x)
    jax.block_until_ready(grads)
    ref_grads = jax.grad(ref_loss)(params, x)
    for name in ("weight", "bias"):
        assert jnp.allclose(grads[name], ref_grads[name], atol=1e-3, rtol=1e-3), name

    print("KERNEL_OK")
</pallas_src>

<mosaic_0001>
module attributes {stable_mosaic.version = 11 : i64} {
  func.func @_linear_gelu_kernel(%arg0: i32, %arg1: i32, %arg2: i32, %arg3: memref<16x128xf32, #tpu.memory_space<vmem>>, %arg4: memref<128x128xf32, #tpu.memory_space<vmem>>, %arg5: memref<1x128xf32, #tpu.memory_space<vmem>>, %arg6: memref<16x128xf32, #tpu.memory_space<vmem>>, %arg7: memref<16x128xf32, #tpu.memory_space<vmem>>) attributes {dimension_semantics = [#tpu.dimension_semantics<parallel>, #tpu.dimension_semantics<parallel>, #tpu.dimension_semantics<arbitrary>], iteration_bounds = array<i64: 1, 1, 1>, scalar_prefetch = 0 : i64, scratch_operands = 1 : i64, tpu.core_type = #tpu.core_type<tc>, window_params = [{transform_indices = @transform_0, window_bounds = array<i64: 16, 128>}, {transform_indices = @transform_1, window_bounds = array<i64: 128, 128>}, {transform_indices = @transform_2, window_bounds = array<i64: 1, 128>}, {transform_indices = @transform_3, window_bounds = array<i64: 16, 128>}]} {
    %c0_i32 = arith.constant 0 : i32
    %0 = arith.cmpi eq, %arg2, %c0_i32 : i32
    %1 = arith.extui %0 : i1 to i32
    %c0_i32_0 = arith.constant 0 : i32
    %2 = arith.cmpi ne, %1, %c0_i32_0 : i32
    scf.if %2 {
      %cst_10 = arith.constant 0.000000e+00 : f32
      %12 = vector.broadcast %cst_10 : f32 to vector<16x128xf32>
      %c0_11 = arith.constant 0 : index
      %c0_12 = arith.constant 0 : index
      %13 = vector.load %arg7[%c0_11, %c0_12] : memref<16x128xf32, #tpu.memory_space<vmem>>, vector<16x128xf32>
      tpu.vector_store %arg7[%c0_11, %c0_12], %12 {strides = array<i32>} : memref<16x128xf32, #tpu.memory_space<vmem>>, vector<16x128xf32>,
    } else {
    }
    %c0 = arith.constant 0 : index
    %c0_1 = arith.constant 0 : index
    %3 = vector.load %arg7[%c0, %c0_1] : memref<16x128xf32, #tpu.memory_space<vmem>>, vector<16x128xf32>
    %c0_2 = arith.constant 0 : index
    %c0_3 = arith.constant 0 : index
    %4 = vector.load %arg3[%c0_2, %c0_3] : memref<16x128xf32, #tpu.memory_space<vmem>>, vector<16x128xf32>
    %c0_4 = arith.constant 0 : index
    %c0_5 = arith.constant 0 : index
    %5 = vector.load %arg4[%c0_4, %c0_5] : memref<128x128xf32, #tpu.memory_space<vmem>>, vector<128x128xf32>
    %cst = arith.constant dense<0.000000e+00> : vector<16x128xf32>
    %6 = tpu.matmul %4, %5, %cst {dimension_numbers = #tpu.dot_dimension_numbers<[1], [0], [0], [1], [0, 0, 1, 1], [], []>} : vector<16x128xf32>, vector<128x128xf32>, vector<16x128xf32> -> vector<16x128xf32>
    %7 = arith.addf %3, %6 : vector<16x128xf32>
    %c0_6 = arith.constant 0 : index
    %c0_7 = arith.constant 0 : index
    %8 = vector.load %arg7[%c0_6, %c0_7] : memref<16x128xf32, #tpu.memory_space<vmem>>, vector<16x128xf32>
    tpu.vector_store %arg7[%c0_6, %c0_7], %7 {strides = array<i32>} : memref<16x128xf32, #tpu.memory_space<vmem>>, vector<16x128xf32>,
    %c0_i32_8 = arith.constant 0 : i32
    %9 = arith.cmpi eq, %arg2, %c0_i32_8 : i32
    %10 = arith.extui %9 : i1 to i32
    %c0_i32_9 = arith.constant 0 : i32
    %11 = arith.cmpi ne, %10, %c0_i32_9 : i32
    scf.if %11 {
      %c0_10 = arith.constant 0 : index
      %c0_11 = arith.constant 0 : index
      %12 = vector.load %arg7[%c0_10, %c0_11] : memref<16x128xf32, #tpu.memory_space<vmem>>, vector<16x128xf32>
      %c0_12 = arith.constant 0 : index
      %c0_13 = arith.constant 0 : index
      %13 = vector.load %arg5[%c0_12, %c0_13] : memref<1x128xf32, #tpu.memory_space<vmem>>, vector<1x128xf32>
      %14 = vector.broadcast %13 : vector<1x128xf32> to vector<16x128xf32>
      %15 = arith.addf %12, %14 : vector<16x128xf32>
      %16 = arith.mulf %15, %15 : vector<16x128xf32>
      %17 = arith.mulf %15, %16 : vector<16x128xf32>
      %cst_14 = arith.constant 4.471500e-02 : f32
      %18 = vector.broadcast %cst_14 : f32 to vector<16x128xf32>
      %19 = arith.mulf %18, %17 : vector<16x128xf32>
      %20 = arith.addf %15, %19 : vector<16x128xf32>
      %cst_15 = arith.constant 0.797884583 : f32
      %21 = vector.broadcast %cst_15 : f32 to vector<16x128xf32>
      %22 = arith.mulf %21, %20 : vector<16x128xf32>
      %23 = math.tanh %22 : vector<16x128xf32>
      %cst_16 = arith.constant 1.000000e+00 : f32
      %24 = vector.broadcast %cst_16 : f32 to vector<16x128xf32>
      %25 = arith.addf %24, %23 : vector<16x128xf32>
      %cst_17 = arith.constant 5.000000e-01 : f32
      %26 = vector.broadcast %cst_17 : f32 to vector<16x128xf32>
      %27 = arith.mulf %26, %25 : vector<16x128xf32>
      %28 = arith.mulf %15, %27 : vector<16x128xf32>
      %c0_18 = arith.constant 0 : index
      %c0_19 = arith.constant 0 : index
      %29 = vector.load %arg6[%c0_18, %c0_19] : memref<16x128xf32, #tpu.memory_space<vmem>>, vector<16x128xf32>
      tpu.vector_store %arg6[%c0_18, %c0_19], %28 {strides = array<i32>} : memref<16x128xf32, #tpu.memory_space<vmem>>, vector<16x128xf32>,
    } else {
    }
    return
  }
  func.func @transform_0(%arg0: i32, %arg1: i32, %arg2: i32) -> (i32, i32) {
    %c0_i32 = arith.constant 0 : i32
    return %arg0, %arg2 : i32, i32
  }
  func.func @transform_1(%arg0: i32, %arg1: i32, %arg2: i32) -> (i32, i32) {
    %c0_i32 = arith.constant 0 : i32
    return %arg2, %arg1 : i32, i32
  }
  func.func @transform_2(%arg0: i32, %arg1: i32, %arg2: i32) -> (i32, i32) {
    %c0_i32 = arith.constant 0 : i32
    %c0_i32_0 = arith.constant 0 : i32
    return %c0_i32, %arg1 : i32, i32
  }
  func.func @transform_3(%arg0: i32, %arg1: i32, %arg2: i32) -> (i32, i32) {
    %c0_i32 = arith.constant 0 : i32
    return %arg0, %arg1 : i32, i32
  }
}

</mosaic_0001>

<llo_original>
// kernel: checkpoint.1
$region0: #{checkpoint.1}
  #allocation0 [shape = 'u32[]', space=smem, size = 0x4, offset = 0x4, fixed_abs, tag = 'smem constant byte address 0x4 - core index']
  #allocation1 [shape = 'u32[144,128]{1,0:T(1,128)}', space=vmem, size = 0x12000, scoped, tag = 'internal scratch']
  #allocation2 [shape = 'f32[16,128]{1,0:T(8,128)}', space=vmem, size = 0x2000, scoped, tag = 'scratch operand']
  %s0 = inlined_call_operand.vmem [shape: f32[16,128], index: 0, kind: input, shape index: {}]
  %s1 = inlined_call_operand.vmem [shape: f32[128,128], index: 1, kind: input, shape index: {}]
  %s2 = inlined_call_operand.vmem [shape: f32[1,128], index: 2, kind: input, shape index: {}]
  %s3 = inlined_call_operand.vmem [shape: f32[16,128], index: 3, kind: output, shape index: {}]
  %s4 = sld [smem:[#allocation0]]
  $region30: #{checkpoint.1} parent=0
    _
  %s6 = ssub.s32 1, %s4
  %s7 = scalar_select 0, %s6, %s4
  // Predicated region
  $region2: #{checkpoint.1} parent=0 // pred_check
    _
  $region3: #{checkpoint.1} parent=0 // pred_check_branch
    %9 = sbr.rel (0) target = $region5
  $region4: #{checkpoint.1} parent=0 // pred_region
    _
  $region5: #{checkpoint.1} parent=0 // pred_fallthru
    _
  // Predicated region
  $region6: #{checkpoint.1} parent=0 // pred_check
    _
  $region7: #{checkpoint.1} parent=0 // pred_check_branch
    %11 = sbr.rel (0) target = $region9
  $region8: #{checkpoint.1} parent=0 // pred_region
    _
  $region9: #{checkpoint.1} parent=0 // pred_fallthru
    _
  // Predicated region
  $region10: #{checkpoint.1} parent=0 // pred_check
    _
  $region11: #{checkpoint.1} parent=0 // pred_check_branch
    %13 = sbr.rel (0) target = $region13
  $region12: #{checkpoint.1} parent=0 // pred_region
    _
  $region13: #{checkpoint.1} parent=0 // pred_fallthru
    _
  %p14 = scmp.eq.s32.totalorder 0, 0
  // Predicated region
  $region14: #{checkpoint.1} parent=0 // pred_check
    %p15 = pneg %p14
  $region15: #{checkpoint.1} parent=0 // pred_check_branch
    %17 = sbr.rel (%p15) target = $region17
  $region16: #{checkpoint.1} parent=0 // pred_region
    %18 = vst [vmem:[#allocation2] sm:$0xff] 0.0
    %19 = vst [vmem:[#allocation2 + $0x8] sm:$0xff] 0.0
  $region17: #{checkpoint.1} parent=0 // pred_fallthru
    _
  %v20 = vld [vmem:[#allocation2] sm:$0xff]
  %v21 = vld [vmem:[#allocation2 + $0x8] sm:$0xff]
  %v22 = vld [vmem:[%s0] sm:$0xff]
  %v23 = vld [vmem:[%s0 + $0x8] sm:$0xff]
  %v24 = vld [vmem:[%s1] sm:$0xff]
  %v25 = vld [vmem:[%s1 + $0x8] sm:$0xff]
  %v26 = vld [vmem:[%s1 + $0x10] sm:$0xff]
  %v27 = vld [vmem:[%s1 + $0x18] sm:$0xff]
  %v28 = vld [vmem:[%s1 + $0x20] sm:$0xff]
  %v29 = vld [vmem:[%s1 + $0x28] sm:$0xff]
  %v30 = vld [vmem:[%s1 + $0x30] sm:$0xff]
  %v31 = vld [vmem:[%s1 + $0x38] sm:$0xff]
  %v32 = vld [vmem:[%s1 + $0x40] sm:$0xff]
  %v33 = vld [vmem:[%s1 + $0x48] sm:$0xff]
  %v34 = vld [vmem:[%s1 + $0x50] sm:$0xff]
  %v35 = vld [vmem:[%s1 + $0x58] sm:$0xff]
  %v36 = vld [vmem:[%s1 + $0x60] sm:$0xff]
  %v37 = vld [vmem:[%s1 + $0x68] sm:$0xff]
  %v38 = vld [vmem:[%s1 + $0x70] sm:$0xff]
  %v39 = vld [vmem:[%s1 + $0x78] sm:$0xff]
  %40 = vmatprep.subr.mxu0 0.0
  %41 = vmatpush1.msra.mxu0 %v39
  %42 = vmatprep.subr.mxu0 0.0
  %43 = vmatpush1.msra.mxu0 %v38
  %44 = vmatprep.subr.mxu0 0.0
  %45 = vmatpush1.msra.mxu0 %v37
  %46 = vmatprep.subr.mxu0 0.0
  %47 = vmatpush1.msra.mxu0 %v36
  %48 = vmatprep.subr.mxu0 0.0
  %49 = vmatpush1.msra.mxu0 %v35
  %50 = vmatprep.subr.mxu0 0.0
  %51 = vmatpush1.msra.mxu0 %v34
  %52 = vmatprep.subr.mxu0 0.0
  %53 = vmatpush1.msra.mxu0 %v33
  %54 = vmatprep.subr.mxu0 0.0
  %55 = vmatpush1.msra.mxu0 %v32
  %56 = vmatprep.subr.mxu0 0.0
  %57 = vmatpush1.msra.mxu0 %v31
  %58 = vmatprep.subr.mxu0 0.0
  %59 = vmatpush1.msra.mxu0 %v30
  %60 = vmatprep.subr.mxu0 0.0
  %61 = vmatpush1.msra.mxu0 %v29
  %62 = vmatprep.subr.mxu0 0.0
  %63 = vmatpush1.msra.mxu0 %v28
  %64 = vmatprep.subr.mxu0 0.0
  %65 = vmatpush1.msra.mxu0 %v27
  %66 = vmatprep.subr.mxu0 0.0
  %67 = vmatpush1.msra.mxu0 %v26
  %68 = vmatprep.subr.mxu0 0.0
  %69 = vmatpush1.msra.mxu0 %v25
  %70 = vmatprep.subr.mxu0 0.0
  %71 = vmatpush1.msra.mxu0 %v24
  %72 = vmatprep.subr.mxu0 0.0
  %73 = vmatpush2.msra.mxu0 0.0
  %74 = vmatprep.subr.mxu0 0.0
  %75 = vmatpush2.msra.mxu0 0.0
  %76 = vmatprep.subr.mxu0 0.0
  %77 = vmatpush2.msra.mxu0 0.0
  %78 = vmatprep.subr.mxu0 0.0
  %79 = vmatpush2.msra.mxu0 0.0
  %80 = vmatprep.subr.mxu0 0.0
  %81 = vmatpush2.msra.mxu0 0.0
  %82 = vmatprep.subr.mxu0 0.0
  %83 = vmatpush2.msra.mxu0 0.0
  %84 = vmatprep.subr.mxu0 0.0
  %85 = vmatpush2.msra.mxu0 0.0
  %86 = vmatprep.subr.mxu0 0.0
  %87 = vmatpush2.msra.mxu0 0.0
  %88 = vmatprep.subr.mxu0 0.0
  %89 = vmatpush2.msra.mxu0 0.0
  %90 = vmatprep.subr.mxu0 0.0
  %91 = vmatpush2.msra.mxu0 0.0
  %92 = vmatprep.subr.mxu0 0.0
  %93 = vmatpush2.msra.mxu0 0.0
  %94 = vmatprep.subr.mxu0 0.0
  %95 = vmatpush2.msra.mxu0 0.0
  %96 = vmatprep.subr.mxu0 0.0
  %97 = vmatpush2.msra.mxu0 0.0
  %98 = vmatprep.subr.mxu0 0.0
  %99 = vmatpush2.msra.mxu0 0.0
  %100 = vmatprep.subr.mxu0 0.0
  %101 = vmatpush2.msra.mxu0 0.0
  %102 = vmatprep.subr.mxu0 0.0
  %103 = vmatpush2.msra.mxu0 0.0
  %104 = vmatprep.mubr.f32.mxu0 0.0
  %105 = vmatmul.mubr.f32.gmra.mxu0 %v22
  %v106 = vpop.f32.mrf.mxu0
  %v107 = vadd.f32 0.0, %v106
  %v108 = vpop.f32.mrf.mxu0
  %109 = vmatprep.mubr.f32.mxu0 0.0
  %110 = vmatmul.mubr.f32.gmra.mxu0 %v23
  %v111 = vpop.f32.mrf.mxu0
  %v112 = vadd.f32 0.0, %v111
  %v113 = vpop.f32.mrf.mxu0
  %114 = vdwg.mxu0
  %v115 = vadd.f32 %v20, %v107
  %v116 = vadd.f32 %v21, %v112
  %117 = vst [vmem:[#allocation2] sm:$0xff] %v115
  %118 = vst [vmem:[#allocation2 + $0x8] sm:$0xff] %v116
  // Predicated region
  $region18: #{checkpoint.1} parent=0 // pred_check
    %p119 = pneg %p14
  $region19: #{checkpoint.1} parent=0 // pred_check_branch
    %121 = sbr.rel (%p119) target = $region21
  $region20: #{checkpoint.1} parent=0 // pred_region
    %v122 = vld [vmem:[#allocation2] sm:$0xff]
    %v123 = vld [vmem:[#allocation2 + $0x8] sm:$0xff]
    %v124 = vld [vmem:[%s2] sm:$0x1]
    %v126 = vlaneseq
    %v127 = vshrl.u32 %v126, 7
    %v128 = vsub.s32 0, %v127
    %v129 = vrot.slane %v124, %v128
    %v131 = vadd.f32 %v122, %v129
    %v132 = vadd.f32 %v123, %v129
    %v133 = vmul.f32 %v131, %v131
    %v134 = vmul.f32 %v132, %v132
    %v135 = vmul.f32 %v131, %v133
    %v136 = vmul.f32 %v132, %v134
    %v137 = vmul.f32 %v135, 0.044715
    %v138 = vmul.f32 %v136, 0.044715
    %v139 = vadd.f32 %v131, %v137
    %v140 = vadd.f32 %v132, %v138
    %v141 = vmul.f32 %v139, 0.7978846
    %v142 = vmul.f32 %v140, 0.7978846
    %v143 = vtanh.pop %v141
    %v144 = vtanh.pop %v142
    %v145 = vadd.f32 %v143, 1.0
    %v146 = vadd.f32 %v144, 1.0
    %v147 = vmul.f32 %v145, 0.5
    %v148 = vmul.f32 %v146, 0.5
    %v149 = vmul.f32 %v131, %v147
    %v150 = vmul.f32 %v132, %v148
    %151 = vst [vmem:[%s3] sm:$0xff] %v149
    %152 = vst [vmem:[%s3 + $0x8] sm:$0xff] %v150
  $region21: #{checkpoint.1} parent=0 // pred_fallthru
    _
  // Predicated region
  $region22: #{checkpoint.1} parent=0 // pred_check
    _
  $region23: #{checkpoint.1} parent=0 // pred_check_branch
    %154 = sbr.rel (0) target = $region25
  $region24: #{checkpoint.1} parent=0 // pred_region
    _
  $region25: #{checkpoint.1} parent=0 // pred_fallthru
    _
  // Predicated region
  $region26: #{checkpoint.1} parent=0 // pred_check
    _
  $region27: #{checkpoint.1} parent=0 // pred_check_branch
    %156 = sbr.rel (0) target = $region29
  $region28: #{checkpoint.1} parent=0 // pred_region
    _
  $region29: #{checkpoint.1} parent=0 // pred_fallthru
    _

</llo_original>
